<compile_context>
chip_gen: v7x
topology: tpu7x:2x2x1
jax: 0.10.0
libtpu: 0.0.40
codegen_flags: <defaults>
</compile_context>

<pallas_src>
import functools

import jax
import jax.numpy as jnp
from jax.experimental import pallas as pl
from jax.experimental.pallas import tpu as pltpu

LANE = 128  # TPU lane width; every feature block is padded to a 128-lane slot


def cvae_fused_kernel(in_ref, w_ref, b_ref, out_ref):
    """Whole CVAE forward for one batch tile. All slices are 128-lane aligned."""
    mat_dt = w_ref.dtype                         # bf16 MXU operands, f32 accumulation

    xy = in_ref[:, 0:LANE].astype(mat_dt)        # [x | y]   (lanes 0:F+C used)
    eps = in_ref[:, LANE:2 * LANE]               # eps        (lanes 0:L used, f32)

    w_enc = w_ref[:, 0:2 * LANE]                 # (128, 256): [W1x;W1y] | [0;W2y]
    w_head = w_ref[:, 2 * LANE:4 * LANE]         # (128, 256): Wmu | Wlv
    w_dec_z = w_ref[:, 4 * LANE:5 * LANE]        # (128, 128): W2z
    w_out = w_ref[:, 5 * LANE:6 * LANE]          # (128, 128): W3

    b_enc = b_ref[:, 0:2 * LANE]                 # b1 | b2
    b_head = b_ref[:, 2 * LANE:4 * LANE]         # bmu | blv
    b_out = b_ref[:, 4 * LANE:5 * LANE]          # b3

    # One 256-wide matmul: cols 0:128 -> x@W1x + y@W1y + b1 ; cols 128:256 -> y@W2y + b2
    pre = jnp.dot(xy, w_enc, preferred_element_type=jnp.float32) + b_enc
    h_enc = jnp.maximum(pre[:, :LANE], 0.0)      # relu([x,y] @ W1 + b1)
    ydec_pre = pre[:, LANE:]                     # y @ W2y + b2   (no relu)

    # Fused mu/logvar head: one 256-wide matmul, mu in cols 0:128, logvar in 128:256
    head = (jnp.dot(h_enc.astype(mat_dt), w_head, preferred_element_type=jnp.float32)
            + b_head)
    mu = head[:, :LANE]
    logvar = head[:, LANE:]

    # Reparameterization (f32 elementwise; padded lanes stay exactly 0: 0 + exp(0)*0)
    z = mu + jnp.exp(0.5 * logvar) * eps

    # Decoder: relu(z @ W2z + y @ W2y + b2)
    h_dec = jnp.maximum(
        jnp.dot(z.astype(mat_dt), w_dec_z, preferred_element_type=jnp.float32)
        + ydec_pre,
        0.0)

    recon = jax.nn.sigmoid(
        jnp.dot(h_dec.astype(mat_dt), w_out, preferred_element_type=jnp.float32)
        + b_out)

    # Single lane-dense output slab: [recon | mu | logvar]
    out_ref[:, 0:LANE] = recon
    out_ref[:, LANE:2 * LANE] = mu
    out_ref[:, 2 * LANE:3 * LANE] = logvar


def _round_up(n, m):
    return ((n + m - 1) // m) * m


def prepare_params(params):
    """One-time weight preparation, hoisted out of the per-call forward path."""
    F, H = params["W1x"].shape
    C = params["W1y"].shape[0]
    L = params["Wmu"].shape[1]
    assert F + C <= LANE and H <= LANE and L <= LANE, "add K/N tiling for larger dims"

    w = jnp.zeros((LANE, 6 * LANE), jnp.float32)
    # encoder block: cols 0:128 -> [W1x ; W1y], cols 128:256 -> [0 ; W2y]
    w = w.at[:F, 0:H].set(params["W1x"])
    w = w.at[F:F + C, 0:H].set(params["W1y"])
    w = w.at[F:F + C, LANE:LANE + H].set(params["W2y"])
    # head block: cols 256:384 -> Wmu, cols 384:512 -> Wlv
    w = w.at[:H, 2 * LANE:2 * LANE + L].set(params["Wmu"])
    w = w.at[:H, 3 * LANE:3 * LANE + L].set(params["Wlv"])
    # decoder-z block: cols 512:640 -> W2z
    w = w.at[:L, 4 * LANE:4 * LANE + H].set(params["W2z"])
    # output block: cols 640:768 -> W3
    w = w.at[:H, 5 * LANE:5 * LANE + F].set(params["W3"])
    w_slab = w.astype(jnp.bfloat16)              # MXU operands; f32 accumulation in-kernel

    b = jnp.zeros((1, 5 * LANE), jnp.float32)
    b = b.at[:, 0:H].set(params["b1"])
    b = b.at[:, LANE:LANE + H].set(params["b2"])
    b = b.at[:, 2 * LANE:2 * LANE + L].set(params["bmu"])
    b = b.at[:, 3 * LANE:3 * LANE + L].set(params["blv"])
    b = b.at[:, 4 * LANE:4 * LANE + F].set(params["b3"])

    return {
        "w_slab": jax.block_until_ready(w_slab),
        "b_slab": jax.block_until_ready(b),
        "dims": (int(F), int(C), int(H), int(L)),
    }


@functools.partial(jax.jit, static_argnames=("dims",))
def _cvae_forward(x, y, eps, w_slab, b_slab, dims):
    F, C, H, L = dims
    B = x.shape[0]

    # Batch tile: >=16 rows (bf16 sublane packing), up to 256; grid=1 for small B,
    # >=2 steps for large batches so v7x's two TensorCores both get work.
    TB = min(_round_up(B, 16), 256)
    Bp = _round_up(B, TB)

    # Single lane-dense input slab: [x | y] in lanes 0:128, eps in lanes 128:256.
    xy = jnp.concatenate([x, y], axis=1)                               # (B, F+C)
    xy_p = jnp.pad(xy, ((0, Bp - B), (0, LANE - (F + C))))             # (Bp, 128)
    eps_p = jnp.pad(eps, ((0, Bp - B), (0, LANE - L)))                 # (Bp, 128)
    in_slab = jnp.concatenate([xy_p, eps_p], axis=1)                   # (Bp, 256) f32

    out = pl.pallas_call(
        cvae_fused_kernel,
        out_shape=jax.ShapeDtypeStruct((Bp, 3 * LANE), jnp.float32),
        grid=(Bp // TB,),
        in_specs=[
            pl.BlockSpec((TB, 2 * LANE), lambda i: (i, 0)),      # input slab (tiled)
            pl.BlockSpec((LANE, 6 * LANE), lambda i: (0, 0)),    # weight slab (resident)
            pl.BlockSpec((1, 5 * LANE), lambda i: (0, 0)),       # bias slab (resident)
        ],
        out_specs=pl.BlockSpec((TB, 3 * LANE), lambda i: (i, 0)),
        compiler_params=pltpu.CompilerParams(dimension_semantics=("parallel",)),
    )(in_slab, w_slab, b_slab)

    recon = out[:B, :F]
    mu = out[:B, LANE:LANE + L]
    logvar = out[:B, 2 * LANE:2 * LANE + L]
    return recon, mu, logvar


def conditional_cvae_forward(x, y, eps, prepared):
    return _cvae_forward(x, y, eps, prepared["w_slab"], prepared["b_slab"],
                         prepared["dims"])


def init_params(key, n_features, n_classes, latent_dim, hidden):
    """PyTorch nn.Linear-style init: U(+-1/sqrt(fan_in)) for weights AND biases.

    The concatenated layers Linear(F+C, H) and Linear(L+C, H) are stored as split
    column blocks, all initialized with the fan-in of the full concatenated layer.
    """
    def linear(k, fan_in, shape):
        bound = 1.0 / (float(fan_in) ** 0.5)
        return jax.random.uniform(k, shape, jnp.float32, minval=-bound, maxval=bound)

    ks = jax.random.split(key, 12)
    F, C, L, H = n_features, n_classes, latent_dim, hidden
    return {
        # encoder Linear(F+C, H) split into x / y column blocks
        "W1x": linear(ks[0], F + C, (F, H)),
        "W1y": linear(ks[1], F + C, (C, H)),
        "b1":  linear(ks[2], F + C, (1, H)),
        "Wmu": linear(ks[3], H, (H, L)),
        "bmu": linear(ks[4], H, (1, L)),
        "Wlv": linear(ks[5], H, (H, L)),
        "blv": linear(ks[6], H, (1, L)),
        # decoder Linear(L+C, H) split into z / y column blocks
        "W2z": linear(ks[7], L + C, (L, H)),
        "W2y": linear(ks[8], L + C, (C, H)),
        "b2":  linear(ks[9], L + C, (1, H)),
        "W3":  linear(ks[10], H, (H, F)),
        "b3":  linear(ks[11], H, (1, F)),
    }


def reference_forward(x, y, eps, p):
    """Plain-JAX f32 reference for correctness check."""
    h = jnp.maximum(x @ p["W1x"] + y @ p["W1y"] + p["b1"], 0.0)
    mu = h @ p["Wmu"] + p["bmu"]
    logvar = h @ p["Wlv"] + p["blv"]
    z = mu + jnp.exp(0.5 * logvar) * eps
    hd = jnp.maximum(z @ p["W2z"] + y @ p["W2y"] + p["b2"], 0.0)
    recon = jax.nn.sigmoid(hd @ p["W3"] + p["b3"])
    return recon, mu, logvar


if __name__ == "__main__":
    # small shapes consistent with the module: tabular features + one-hot labels
    batch = 8
    n_features = 32
    n_classes = 4
    latent_dim = 16
    hidden = 64

    key = jax.random.PRNGKey(0)
    k_x, k_lbl, k_eps, k_par = jax.random.split(key, 4)

    x = jax.random.normal(k_x, (batch, n_features), jnp.float32)
    labels = jax.random.randint(k_lbl, (batch,), 0, n_classes)
    y = jax.nn.one_hot(labels, n_classes, dtype=jnp.float32)
    eps = jax.random.normal(k_eps, (batch, latent_dim), jnp.float32)

    params = init_params(k_par, n_features, n_classes, latent_dim, hidden)
    prepared = prepare_params(params)        # one-time weight prep (hoisted)

    recon, mu, logvar = conditional_cvae_forward(x, y, eps, prepared)
    jax.block_until_ready((recon, mu, logvar))

    r_ref, mu_ref, lv_ref = reference_forward(x, y, eps, params)
    # bf16 MXU operands (f32 accumulation) -> loosen tolerance vs f32 reference
    assert jnp.allclose(recon, r_ref, rtol=3e-2, atol=3e-2), "recon mismatch"
    assert jnp.allclose(mu, mu_ref, rtol=3e-2, atol=3e-2), "mu mismatch"
    assert jnp.allclose(logvar, lv_ref, rtol=3e-2, atol=3e-2), "logvar mismatch"

    print("KERNEL_OK")
</pallas_src>

<mosaic_0001>
module attributes {stable_mosaic.version = 11 : i64} {
  func.func @cvae_fused_kernel(%arg0: i32, %arg1: memref<16x256xf32, #tpu.memory_space<vmem>>, %arg2: memref<128x768xbf16, #tpu.memory_space<vmem>>, %arg3: memref<1x640xf32, #tpu.memory_space<vmem>>, %arg4: memref<16x384xf32, #tpu.memory_space<vmem>>) attributes {dimension_semantics = [#tpu.dimension_semantics<parallel>], iteration_bounds = array<i64: 1>, scalar_prefetch = 0 : i64, scratch_operands = 0 : i64, tpu.core_type = #tpu.core_type<tc>, window_params = [{transform_indices = @transform_0, window_bounds = array<i64: 16, 256>}, {pipeline_mode = #tpu.pipeline_mode<synchronous>, transform_indices = @transform_1, window_bounds = array<i64: 128, 768>}, {pipeline_mode = #tpu.pipeline_mode<synchronous>, transform_indices = @transform_2, window_bounds = array<i64: 1, 640>}, {transform_indices = @transform_3, window_bounds = array<i64: 16, 384>}]} {
    %c0 = arith.constant 0 : index
    %c0_0 = arith.constant 0 : index
    %0 = vector.load %arg1[%c0, %c0_0] : memref<16x256xf32, #tpu.memory_space<vmem>>, vector<16x128xf32>
    %1 = arith.truncf %0 : vector<16x128xf32> to vector<16x128xbf16>
    %c0_1 = arith.constant 0 : index
    %c128 = arith.constant 128 : index
    %2 = vector.load %arg1[%c0_1, %c128] : memref<16x256xf32, #tpu.memory_space<vmem>>, vector<16x128xf32>
    %c0_2 = arith.constant 0 : index
    %c0_3 = arith.constant 0 : index
    %3 = vector.load %arg2[%c0_2, %c0_3] : memref<128x768xbf16, #tpu.memory_space<vmem>>, vector<128x256xbf16>
    %c0_4 = arith.constant 0 : index
    %c256 = arith.constant 256 : index
    %4 = vector.load %arg2[%c0_4, %c256] : memref<128x768xbf16, #tpu.memory_space<vmem>>, vector<128x256xbf16>
    %c0_5 = arith.constant 0 : index
    %c512 = arith.constant 512 : index
    %5 = vector.load %arg2[%c0_5, %c512] : memref<128x768xbf16, #tpu.memory_space<vmem>>, vector<128x128xbf16>
    %c0_6 = arith.constant 0 : index
    %c640 = arith.constant 640 : index
    %6 = vector.load %arg2[%c0_6, %c640] : memref<128x768xbf16, #tpu.memory_space<vmem>>, vector<128x128xbf16>
    %c0_7 = arith.constant 0 : index
    %c0_8 = arith.constant 0 : index
    %7 = vector.load %arg3[%c0_7, %c0_8] : memref<1x640xf32, #tpu.memory_space<vmem>>, vector<1x256xf32>
    %c0_9 = arith.constant 0 : index
    %c256_10 = arith.constant 256 : index
    %8 = vector.load %arg3[%c0_9, %c256_10] : memref<1x640xf32, #tpu.memory_space<vmem>>, vector<1x256xf32>
    %c0_11 = arith.constant 0 : index
    %c512_12 = arith.constant 512 : index
    %9 = vector.load %arg3[%c0_11, %c512_12] : memref<1x640xf32, #tpu.memory_space<vmem>>, vector<1x128xf32>
    %cst = arith.constant dense<0.000000e+00> : vector<16x256xf32>
    %10 = tpu.matmul %1, %3, %cst {dimension_numbers = #tpu.dot_dimension_numbers<[1], [0], [0], [1], [0, 0, 1, 1], [], []>} : vector<16x128xbf16>, vector<128x256xbf16>, vector<16x256xf32> -> vector<16x256xf32>
    %11 = vector.broadcast %7 : vector<1x256xf32> to vector<16x256xf32>
    %12 = arith.addf %10, %11 : vector<16x256xf32>
    %13 = vector.extract_strided_slice %12 {offsets = [0, 0], sizes = [16, 128], strides = [1, 1]} : vector<16x256xf32> to vector<16x128xf32>
    %cst_13 = arith.constant 0.000000e+00 : f32
    %14 = vector.broadcast %cst_13 : f32 to vector<16x128xf32>
    %15 = arith.maximumf %13, %14 : vector<16x128xf32>
    %16 = vector.extract_strided_slice %12 {offsets = [0, 128], sizes = [16, 128], strides = [1, 1]} : vector<16x256xf32> to vector<16x128xf32>
    %17 = arith.truncf %15 : vector<16x128xf32> to vector<16x128xbf16>
    %cst_14 = arith.constant dense<0.000000e+00> : vector<16x256xf32>
    %18 = tpu.matmul %17, %4, %cst_14 {dimension_numbers = #tpu.dot_dimension_numbers<[1], [0], [0], [1], [0, 0, 1, 1], [], []>} : vector<16x128xbf16>, vector<128x256xbf16>, vector<16x256xf32> -> vector<16x256xf32>
    %19 = vector.broadcast %8 : vector<1x256xf32> to vector<16x256xf32>
    %20 = arith.addf %18, %19 : vector<16x256xf32>
    %21 = vector.extract_strided_slice %20 {offsets = [0, 0], sizes = [16, 128], strides = [1, 1]} : vector<16x256xf32> to vector<16x128xf32>
    %22 = vector.extract_strided_slice %20 {offsets = [0, 128], sizes = [16, 128], strides = [1, 1]} : vector<16x256xf32> to vector<16x128xf32>
    %cst_15 = arith.constant 5.000000e-01 : f32
    %23 = vector.broadcast %cst_15 : f32 to vector<16x128xf32>
    %24 = arith.mulf %23, %22 : vector<16x128xf32>
    %25 = math.exp %24 : vector<16x128xf32>
    %26 = arith.mulf %25, %2 : vector<16x128xf32>
    %27 = arith.addf %21, %26 : vector<16x128xf32>
    %28 = arith.truncf %27 : vector<16x128xf32> to vector<16x128xbf16>
    %cst_16 = arith.constant dense<0.000000e+00> : vector<16x128xf32>
    %29 = tpu.matmul %28, %5, %cst_16 {dimension_numbers = #tpu.dot_dimension_numbers<[1], [0], [0], [1], [0, 0, 1, 1], [], []>} : vector<16x128xbf16>, vector<128x128xbf16>, vector<16x128xf32> -> vector<16x128xf32>
    %30 = arith.addf %29, %16 : vector<16x128xf32>
    %cst_17 = arith.constant 0.000000e+00 : f32
    %31 = vector.broadcast %cst_17 : f32 to vector<16x128xf32>
    %32 = arith.maximumf %30, %31 : vector<16x128xf32>
    %33 = arith.truncf %32 : vector<16x128xf32> to vector<16x128xbf16>
    %cst_18 = arith.constant dense<0.000000e+00> : vector<16x128xf32>
    %34 = tpu.matmul %33, %6, %cst_18 {dimension_numbers = #tpu.dot_dimension_numbers<[1], [0], [0], [1], [0, 0, 1, 1], [], []>} : vector<16x128xbf16>, vector<128x128xbf16>, vector<16x128xf32> -> vector<16x128xf32>
    %35 = vector.broadcast %9 : vector<1x128xf32> to vector<16x128xf32>
    %36 = arith.addf %34, %35 : vector<16x128xf32>
    %37 = arith.negf %36 : vector<16x128xf32>
    %38 = math.exp %37 : vector<16x128xf32>
    %cst_19 = arith.constant 1.000000e+00 : f32
    %39 = vector.broadcast %cst_19 : f32 to vector<16x128xf32>
    %40 = arith.addf %39, %38 : vector<16x128xf32>
    %41 = arith.divf %39, %40 : vector<16x128xf32>
    %c0_20 = arith.constant 0 : index
    %c0_21 = arith.constant 0 : index
    %42 = vector.load %arg4[%c0_20, %c0_21] : memref<16x384xf32, #tpu.memory_space<vmem>>, vector<16x128xf32>
    tpu.vector_store %arg4[%c0_20, %c0_21], %41 {strides = array<i32>} : memref<16x384xf32, #tpu.memory_space<vmem>>, vector<16x128xf32>,
    %c0_22 = arith.constant 0 : index
    %c128_23 = arith.constant 128 : index
    %43 = vector.load %arg4[%c0_22, %c128_23] : memref<16x384xf32, #tpu.memory_space<vmem>>, vector<16x128xf32>
    tpu.vector_store %arg4[%c0_22, %c128_23], %21 {strides = array<i32>} : memref<16x384xf32, #tpu.memory_space<vmem>>, vector<16x128xf32>,
    %c0_24 = arith.constant 0 : index
    %c256_25 = arith.constant 256 : index
    %44 = vector.load %arg4[%c0_24, %c256_25] : memref<16x384xf32, #tpu.memory_space<vmem>>, vector<16x128xf32>
    tpu.vector_store %arg4[%c0_24, %c256_25], %22 {strides = array<i32>} : memref<16x384xf32, #tpu.memory_space<vmem>>, vector<16x128xf32>,
    return
  }
  func.func @transform_0(%arg0: i32) -> (i32, i32) {
    %c0_i32 = arith.constant 0 : i32
    %c0_i32_0 = arith.constant 0 : i32
    return %arg0, %c0_i32 : i32, i32
  }
  func.func @transform_1(%arg0: i32) -> (i32, i32) {
    %c0_i32 = arith.constant 0 : i32
    %c0_i32_0 = arith.constant 0 : i32
    %c0_i32_1 = arith.constant 0 : i32
    return %c0_i32, %c0_i32_0 : i32, i32
  }
  func.func @transform_2(%arg0: i32) -> (i32, i32) {
    %c0_i32 = arith.constant 0 : i32
    %c0_i32_0 = arith.constant 0 : i32
    %c0_i32_1 = arith.constant 0 : i32
    return %c0_i32, %c0_i32_0 : i32, i32
  }
  func.func @transform_3(%arg0: i32) -> (i32, i32) {
    %c0_i32 = arith.constant 0 : i32
    %c0_i32_0 = arith.constant 0 : i32
    return %arg0, %c0_i32 : i32, i32
  }
}

</mosaic_0001>

<llo_original>
// kernel: _cvae_forward.1
$region0: #{_cvae_forward.1}
  #allocation0 [shape = 'u32[]', space=smem, size = 0x4, offset = 0x4, fixed_abs, tag = 'smem constant byte address 0x4 - core index']
  #allocation1 [shape = 'u32[144,128]{1,0:T(1,128)}', space=vmem, size = 0x12000, scoped, tag = 'internal scratch']
  %s0 = inlined_call_operand.vmem [shape: f32[16,256], index: 0, kind: input, shape index: {}]
  %s1 = inlined_call_operand.hbm [shape: bf16[128,768], index: 1, kind: input, shape index: {}]
  %s2 = inlined_call_operand.vmem [shape: f32[1,640], index: 2, kind: input, shape index: {}]
  %s3 = inlined_call_operand.vmem [shape: f32[16,384], index: 3, kind: output, shape index: {}]
  %s4 = sld [smem:[#allocation0]]
  $region26: #{_cvae_forward.1} parent=0
    _
  %s6 = ssub.s32 1, %s4
  %s7 = scalar_select 0, %s6, %s4
  $region1: #{_cvae_forward.1} parent=0
    #allocation2 [shape = 'u8[196608]{0}', space=vmem, size = 0x30000, scoped, tag = 'input window, operand 1, single buffered']
    #allocation3 [shape = 's32[1]{0}', space=sflag, size = 0x4, scoped, tag = 'scoped memory for _cvae_forward.1']
    %8 = vsyncpa [#allocation3], 0
    // Predicated region
    $region2: #{_cvae_forward.1} parent=1 // pred_check
      _
    $region3: #{_cvae_forward.1} parent=1 // pred_check_branch
      %10 = sbr.rel (0) target = $region5
    $region4: #{_cvae_forward.1} parent=1 // pred_region
      _
    $region5: #{_cvae_forward.1} parent=1 // pred_fallthru
      _
    // Predicated region
    $region6: #{_cvae_forward.1} parent=1 // pred_check
      _
    $region7: #{_cvae_forward.1} parent=1 // pred_check_branch
      %12 = sbr.rel (0) target = $region9
    $region8: #{_cvae_forward.1} parent=1 // pred_region
      %s14 = ssub.s32 6144, 6144
      %15 = vsyncadd [#allocation3], %s14
      %s16 = sshll.u32 [#allocation2], 4
      %s17 = int_to_ptr.vmem [resolvable:$true] %s16
      %22 = dma.hbm_to_vmem [thread:$0]  %s1, 6144, %s17, [#allocation3], 384, 384, 24
    $region9: #{_cvae_forward.1} parent=1 // pred_fallthru
      _
    // Predicated region
    $region10: #{_cvae_forward.1} parent=1 // pred_check
      _
    $region11: #{_cvae_forward.1} parent=1 // pred_check_branch
      %24 = sbr.rel (0) target = $region13
    $region12: #{_cvae_forward.1} parent=1 // pred_region
      _
    $region13: #{_cvae_forward.1} parent=1 // pred_fallthru
      _
    // Predicated region
    $region14: #{_cvae_forward.1} parent=1 // pred_check
      _
    $region15: #{_cvae_forward.1} parent=1 // pred_check_branch
      %26 = sbr.rel (0) target = $region17
    $region16: #{_cvae_forward.1} parent=1 // pred_region
      %27 = dma.done [#allocation3], 6144
    $region17: #{_cvae_forward.1} parent=1 // pred_fallthru
      _
    %v29 = vld [vmem:[%s0] sm:$0xff]
    %v30 = vld [vmem:[%s0 + $0x10] sm:$0xff]
    %v31 = vpack.c.bf16 %v30, %v29
    %v32 = vld [vmem:[%s0 + $0x8] sm:$0xff]
    %v33 = vld [vmem:[%s0 + $0x18] sm:$0xff]
    %v34 = vld [vmem:[#allocation2] sm:$0xff]
    %v35 = vld [vmem:[#allocation2 + $0x18] sm:$0xff]
    %v36 = vld [vmem:[#allocation2 + $0x30] sm:$0xff]
    %v37 = vld [vmem:[#allocation2 + $0x48] sm:$0xff]
    %v38 = vld [vmem:[#allocation2 + $0x60] sm:$0xff]
    %v39 = vld [vmem:[#allocation2 + $0x78] sm:$0xff]
    %v40 = vld [vmem:[#allocation2 + $0x90] sm:$0xff]
    %v41 = vld [vmem:[#allocation2 + $0xa8] sm:$0xff]
    %v42 = vld [vmem:[#allocation2 + $0xc0] sm:$0xff]
    %v43 = vld [vmem:[#allocation2 + $0xd8] sm:$0xff]
    %v44 = vld [vmem:[#allocation2 + $0xf0] sm:$0xff]
    %v45 = vld [vmem:[#allocation2 + $0x108] sm:$0xff]
    %v46 = vld [vmem:[#allocation2 + $0x120] sm:$0xff]
    %v47 = vld [vmem:[#allocation2 + $0x138] sm:$0xff]
    %v48 = vld [vmem:[#allocation2 + $0x150] sm:$0xff]
    %v49 = vld [vmem:[#allocation2 + $0x168] sm:$0xff]
    %v50 = vld [vmem:[#allocation2 + $0x8] sm:$0xff]
    %v51 = vld [vmem:[#allocation2 + $0x20] sm:$0xff]
    %v52 = vld [vmem:[#allocation2 + $0x38] sm:$0xff]
    %v53 = vld [vmem:[#allocation2 + $0x50] sm:$0xff]
    %v54 = vld [vmem:[#allocation2 + $0x68] sm:$0xff]
    %v55 = vld [vmem:[#allocation2 + $0x80] sm:$0xff]
    %v56 = vld [vmem:[#allocation2 + $0x98] sm:$0xff]
    %v57 = vld [vmem:[#allocation2 + $0xb0] sm:$0xff]
    %v58 = vld [vmem:[#allocation2 + $0xc8] sm:$0xff]
    %v59 = vld [vmem:[#allocation2 + $0xe0] sm:$0xff]
    %v60 = vld [vmem:[#allocation2 + $0xf8] sm:$0xff]
    %v61 = vld [vmem:[#allocation2 + $0x110] sm:$0xff]
    %v62 = vld [vmem:[#allocation2 + $0x128] sm:$0xff]
    %v63 = vld [vmem:[#allocation2 + $0x140] sm:$0xff]
    %v64 = vld [vmem:[#allocation2 + $0x158] sm:$0xff]
    %v65 = vld [vmem:[#allocation2 + $0x170] sm:$0xff]
    %v66 = vld [vmem:[#allocation2 + $0x10] sm:$0xf]
    %v67 = vld [vmem:[#allocation2 + $0x28] sm:$0xf]
    %v68 = vld [vmem:[#allocation2 + $0x40] sm:$0xf]
    %v69 = vld [vmem:[#allocation2 + $0x58] sm:$0xf]
    %v70 = vld [vmem:[#allocation2 + $0x70] sm:$0xf]
    %v71 = vld [vmem:[#allocation2 + $0x88] sm:$0xf]
    %v72 = vld [vmem:[#allocation2 + $0xa0] sm:$0xf]
    %v73 = vld [vmem:[#allocation2 + $0xb8] sm:$0xf]
    %v74 = vld [vmem:[#allocation2 + $0xd0] sm:$0xf]
    %v75 = vld [vmem:[#allocation2 + $0xe8] sm:$0xf]
    %v76 = vld [vmem:[#allocation2 + $0x100] sm:$0xf]
    %v77 = vld [vmem:[#allocation2 + $0x118] sm:$0xf]
    %v78 = vld [vmem:[#allocation2 + $0x130] sm:$0xf]
    %v79 = vld [vmem:[#allocation2 + $0x148] sm:$0xf]
    %v80 = vld [vmem:[#allocation2 + $0x160] sm:$0xf]
    %v81 = vld [vmem:[#allocation2 + $0x178] sm:$0xf]
    %v82 = vld [vmem:[#allocation2 + $0x14] sm:$0xf]
    %v83 = vld [vmem:[#allocation2 + $0x2c] sm:$0xf]
    %v84 = vld [vmem:[#allocation2 + $0x44] sm:$0xf]
    %v85 = vld [vmem:[#allocation2 + $0x5c] sm:$0xf]
    %v86 = vld [vmem:[#allocation2 + $0x74] sm:$0xf]
    %v87 = vld [vmem:[#allocation2 + $0x8c] sm:$0xf]
    %v88 = vld [vmem:[#allocation2 + $0xa4] sm:$0xf]
    %v89 = vld [vmem:[#allocation2 + $0xbc] sm:$0xf]
    %v90 = vld [vmem:[#allocation2 + $0xd4] sm:$0xf]
    %v91 = vld [vmem:[#allocation2 + $0xec] sm:$0xf]
    %v92 = vld [vmem:[#allocation2 + $0x104] sm:$0xf]
    %v93 = vld [vmem:[#allocation2 + $0x11c] sm:$0xf]
    %v94 = vld [vmem:[#allocation2 + $0x134] sm:$0xf]
    %v95 = vld [vmem:[#allocation2 + $0x14c] sm:$0xf]
    %v96 = vld [vmem:[#allocation2 + $0x164] sm:$0xf]
    %v97 = vld [vmem:[#allocation2 + $0x17c] sm:$0xf]
    %v98 = vld [vmem:[%s2] sm:$0x3]
    %v99 = vld [vmem:[%s2 + $0x2] sm:$0x3]
    %v100 = vld [vmem:[%s2 + $0x4] sm:$0x1]
    %v102 = vlaneseq
    %v103 = vshrl.u32 %v102, 7
    %v104 = vsub.s32 0, %v103
    %v105 = vrot.slane %v98, %v104
    %v106 = vlaneseq
    %v107 = vshrl.u32 %v106, 7
    %v108 = vsub.s32 1, %v107
    %v109 = vrot.slane %v98, %v108
    %v128 = vunpack.c.l.b16 %v34
    %v129 = vunpack.c.h.b16 %v34
    %v130 = vunpack.c.l.b16 %v35
    %v131 = vunpack.c.h.b16 %v35
    %v132 = vunpack.c.l.b16 %v36
    %v133 = vunpack.c.h.b16 %v36
    %v134 = vunpack.c.l.b16 %v37
    %v135 = vunpack.c.h.b16 %v37
    %v136 = vunpack.c.l.b16 %v38
    %v137 = vunpack.c.h.b16 %v38
    %v138 = vunpack.c.l.b16 %v39
    %v139 = vunpack.c.h.b16 %v39
    %v140 = vunpack.c.l.b16 %v40
    %v141 = vunpack.c.h.b16 %v40
    %v142 = vunpack.c.l.b16 %v41
    %v143 = vunpack.c.h.b16 %v41
    %v144 = vunpack.c.l.b16 %v42
    %v145 = vunpack.c.h.b16 %v42
    %v146 = vunpack.c.l.b16 %v43
    %v147 = vunpack.c.h.b16 %v43
    %v148 = vunpack.c.l.b16 %v44
    %v149 = vunpack.c.h.b16 %v44
    %v150 = vunpack.c.l.b16 %v45
    %v151 = vunpack.c.h.b16 %v45
    %v152 = vunpack.c.l.b16 %v46
    %v153 = vunpack.c.h.b16 %v46
    %v154 = vunpack.c.l.b16 %v47
    %v155 = vunpack.c.h.b16 %v47
    %v156 = vunpack.c.l.b16 %v48
    %v157 = vunpack.c.h.b16 %v48
    %v158 = vunpack.c.l.b16 %v49
    %v159 = vunpack.c.h.b16 %v49
    %v160 = vpack.c.b16 %v130, %v128
    %v161 = vpack.c.b16 %v131, %v129
    %v162 = vpack.c.b16 %v134, %v132
    %v163 = vpack.c.b16 %v135, %v133
    %v164 = vpack.c.b16 %v138, %v136
    %v165 = vpack.c.b16 %v139, %v137
    %v166 = vpack.c.b16 %v142, %v140
    %v167 = vpack.c.b16 %v143, %v141
    %v168 = vpack.c.b16 %v146, %v144
    %v169 = vpack.c.b16 %v147, %v145
    %v170 = vpack.c.b16 %v150, %v148
    %v171 = vpack.c.b16 %v151, %v149
    %v172 = vpack.c.b16 %v154, %v152
    %v173 = vpack.c.b16 %v155, %v153
    %v174 = vpack.c.b16 %v158, %v156
    %v175 = vpack.c.b16 %v159, %v157
    %192 = vmatprep.subr.bf16.mxu0 %v161
    %193 = vmatpush1.bf16.msra.mxu0 %v160
    %194 = vmatprep.subr.bf16.mxu0 %v163
    %195 = vmatpush1.bf16.msra.mxu0 %v162
    %196 = vmatprep.subr.bf16.mxu0 %v165
    %197 = vmatpush1.bf16.msra.mxu0 %v164
    %198 = vmatprep.subr.bf16.mxu0 %v167
    %199 = vmatpush1.bf16.msra.mxu0 %v166
    %200 = vmatprep.subr.bf16.mxu0 %v169
    %201 = vmatpush1.bf16.msra.mxu0 %v168
    %202 = vmatprep.subr.bf16.mxu0 %v171
    %203 = vmatpush1.bf16.msra.mxu0 %v170
    %204 = vmatprep.subr.bf16.mxu0 %v173
    %205 = vmatpush1.bf16.msra.mxu0 %v172
    %206 = vmatprep.subr.bf16.mxu0 %v175
    %207 = vmatpush1.bf16.msra.mxu0 %v174
    %208 = vmatprep.subr.bf16.mxu0 0
    %209 = vmatpush1.bf16.msra.mxu0 0
    %210 = vmatprep.subr.bf16.mxu0 0
    %211 = vmatpush1.bf16.msra.mxu0 0
    %212 = vmatprep.subr.bf16.mxu0 0
    %213 = vmatpush1.bf16.msra.mxu0 0
    %214 = vmatprep.subr.bf16.mxu0 0
    %215 = vmatpush1.bf16.msra.mxu0 0
    %216 = vmatprep.subr.bf16.mxu0 0
    %217 = vmatpush1.bf16.msra.mxu0 0
    %218 = vmatprep.subr.bf16.mxu0 0
    %219 = vmatpush1.bf16.msra.mxu0 0
    %220 = vmatprep.subr.bf16.mxu0 0
    %221 = vmatpush1.bf16.msra.mxu0 0
    %222 = vmatprep.subr.bf16.mxu0 0
    %223 = vmatpush1.bf16.msra.mxu0 0
    %224 = vmatprep.mubr.bf16.mxu0 0
    %225 = vmatmul.mubr.bf16.gmra.mrb[0].mxu0 %v31
    %v226 = vpop.f32.mrb[0].mxu0
    %v227 = vadd.f32 %v105, %v226
    %v228 = vpop.f32.mrb[0].mxu0
    %v229 = vadd.f32 %v109, %v228
    %v230 = vpop.f32.mrb[0].mxu0
    %v231 = vadd.f32 %v105, %v230
    %v232 = vpop.f32.mrb[0].mxu0
    %v233 = vadd.f32 %v109, %v232
    %234 = vdwg.mxu0
    %v235 = vmax.f32 %v227, 0.0
    %v236 = vmax.f32 %v231, 0.0
    %v237 = vpack.c.bf16 %v236, %v235
    %v239 = vlaneseq
    %v240 = vshrl.u32 %v239, 7
    %v241 = vsub.s32 0, %v240
    %v242 = vrot.slane %v99, %v241
    %v243 = vlaneseq
    %v244 = vshrl.u32 %v243, 7
    %v245 = vsub.s32 1, %v244
    %v246 = vrot.slane %v99, %v245
    %v265 = vunpack.c.l.b16 %v50
    %v266 = vunpack.c.h.b16 %v50
    %v267 = vunpack.c.l.b16 %v51
    %v268 = vunpack.c.h.b16 %v51
    %v269 = vunpack.c.l.b16 %v52
    %v270 = vunpack.c.h.b16 %v52
    %v271 = vunpack.c.l.b16 %v53
    %v272 = vunpack.c.h.b16 %v53
    %v273 = vunpack.c.l.b16 %v54
    %v274 = vunpack.c.h.b16 %v54
    %v275 = vunpack.c.l.b16 %v55
    %v276 = vunpack.c.h.b16 %v55
    %v277 = vunpack.c.l.b16 %v56
    %v278 = vunpack.c.h.b16 %v56
    %v279 = vunpack.c.l.b16 %v57
    %v280 = vunpack.c.h.b16 %v57
    %v281 = vunpack.c.l.b16 %v58
    %v282 = vunpack.c.h.b16 %v58
    %v283 = vunpack.c.l.b16 %v59
    %v284 = vunpack.c.h.b16 %v59
    %v285 = vunpack.c.l.b16 %v60
    %v286 = vunpack.c.h.b16 %v60
    %v287 = vunpack.c.l.b16 %v61
    %v288 = vunpack.c.h.b16 %v61
    %v289 = vunpack.c.l.b16 %v62
    %v290 = vunpack.c.h.b16 %v62
    %v291 = vunpack.c.l.b16 %v63
    %v292 = vunpack.c.h.b16 %v63
    %v293 = vunpack.c.l.b16 %v64
    %v294 = vunpack.c.h.b16 %v64
    %v295 = vunpack.c.l.b16 %v65
    %v296 = vunpack.c.h.b16 %v65
    %v297 = vpack.c.b16 %v267, %v265
    %v298 = vpack.c.b16 %v268, %v266
    %v299 = vpack.c.b16 %v271, %v269
    %v300 = vpack.c.b16 %v272, %v270
    %v301 = vpack.c.b16 %v275, %v273
    %v302 = vpack.c.b16 %v276, %v274
    %v303 = vpack.c.b16 %v279, %v277
    %v304 = vpack.c.b16 %v280, %v278
    %v305 = vpack.c.b16 %v283, %v281
    %v306 = vpack.c.b16 %v284, %v282
    %v307 = vpack.c.b16 %v287, %v285
    %v308 = vpack.c.b16 %v288, %v286
    %v309 = vpack.c.b16 %v291, %v289
    %v310 = vpack.c.b16 %v292, %v290
    %v311 = vpack.c.b16 %v295, %v293
    %v312 = vpack.c.b16 %v296, %v294
    %329 = vmatprep.subr.bf16.mxu0 %v298
    %330 = vmatpush1.bf16.msra.mxu0 %v297
    %331 = vmatprep.subr.bf16.mxu0 %v300
    %332 = vmatpush1.bf16.msra.mxu0 %v299
    %333 = vmatprep.subr.bf16.mxu0 %v302
    %334 = vmatpush1.bf16.msra.mxu0 %v301
    %335 = vmatprep.subr.bf16.mxu0 %v304
    %336 = vmatpush1.bf16.msra.mxu0 %v303
    %337 = vmatprep.subr.bf16.mxu0 %v306
    %338 = vmatpush1.bf16.msra.mxu0 %v305
    %339 = vmatprep.subr.bf16.mxu0 %v308
    %340 = vmatpush1.bf16.msra.mxu0 %v307
    %341 = vmatprep.subr.bf16.mxu0 %v310
    %342 = vmatpush1.bf16.msra.mxu0 %v309
    %343 = vmatprep.subr.bf16.mxu0 %v312
    %344 = vmatpush1.bf16.msra.mxu0 %v311
    %345 = vmatprep.subr.bf16.mxu0 0
    %346 = vmatpush1.bf16.msra.mxu0 0
    %347 = vmatprep.subr.bf16.mxu0 0
    %348 = vmatpush1.bf16.msra.mxu0 0
    %349 = vmatprep.subr.bf16.mxu0 0
    %350 = vmatpush1.bf16.msra.mxu0 0
    %351 = vmatprep.subr.bf16.mxu0 0
    %352 = vmatpush1.bf16.msra.mxu0 0
    %353 = vmatprep.subr.bf16.mxu0 0
    %354 = vmatpush1.bf16.msra.mxu0 0
    %355 = vmatprep.subr.bf16.mxu0 0
    %356 = vmatpush1.bf16.msra.mxu0 0
    %357 = vmatprep.subr.bf16.mxu0 0
    %358 = vmatpush1.bf16.msra.mxu0 0
    %359 = vmatprep.subr.bf16.mxu0 0
    %360 = vmatpush1.bf16.msra.mxu0 0
    %361 = vmatprep.mubr.bf16.mxu0 0
    %362 = vmatmul.mubr.bf16.gmra.mrb[0].mxu0 %v237
    %v363 = vpop.f32.mrb[0].mxu0
    %v364 = vadd.f32 %v242, %v363
    %v365 = vpop.f32.mrb[0].mxu0
    %v366 = vadd.f32 %v246, %v365
    %v367 = vpop.f32.mrb[0].mxu0
    %v368 = vadd.f32 %v242, %v367
    %v369 = vpop.f32.mrb[0].mxu0
    %v370 = vadd.f32 %v246, %v369
    %371 = vdwg.mxu0
    %v372 = vmul.f32 %v366, 0.5
    %v373 = vmul.f32 %v370, 0.5
    %v374 = vmul.f32 %v372, 1.442695
    %v375 = vpow.pop %v374
    %v376 = vmul.f32 %v373, 1.442695
    %v377 = vpow.pop %v376
    %v378 = vmul.f32 %v375, %v32
    %v379 = vmul.f32 %v377, %v33
    %v380 = vadd.f32 %v364, %v378
    %v381 = vadd.f32 %v368, %v379
    %v382 = vpack.c.bf16 %v381, %v380
    %v399 = vunpack.c.l.b16 %v66
    %v400 = vunpack.c.l.b16 %v67
    %v401 = vunpack.c.l.b16 %v68
    %v402 = vunpack.c.l.b16 %v69
    %v403 = vunpack.c.l.b16 %v70
    %v404 = vunpack.c.l.b16 %v71
    %v405 = vunpack.c.l.b16 %v72
    %v406 = vunpack.c.l.b16 %v73
    %v407 = vunpack.c.l.b16 %v74
    %v408 = vunpack.c.l.b16 %v75
    %v409 = vunpack.c.l.b16 %v76
    %v410 = vunpack.c.l.b16 %v77
    %v411 = vunpack.c.l.b16 %v78
    %v412 = vunpack.c.l.b16 %v79
    %v413 = vunpack.c.l.b16 %v80
    %v414 = vunpack.c.l.b16 %v81
    %v415 = vpack.c.b16 %v400, %v399
    %v416 = vpack.c.b16 %v402, %v401
    %v417 = vpack.c.b16 %v404, %v403
    %v418 = vpack.c.b16 %v406, %v405
    %v419 = vpack.c.b16 %v408, %v407
    %v420 = vpack.c.b16 %v410, %v409
    %v421 = vpack.c.b16 %v412, %v411
    %v422 = vpack.c.b16 %v414, %v413
    %431 = vmatprep.subr.bf16.mxu0 0
    %432 = vmatpush1.bf16.msra.mxu0 %v415
    %433 = vmatprep.subr.bf16.mxu0 0
    %434 = vmatpush1.bf16.msra.mxu0 %v416
    %435 = vmatprep.subr.bf16.mxu0 0
    %436 = vmatpush1.bf16.msra.mxu0 %v417
    %437 = vmatprep.subr.bf16.mxu0 0
    %438 = vmatpush1.bf16.msra.mxu0 %v418
    %439 = vmatprep.subr.bf16.mxu0 0
    %440 = vmatpush1.bf16.msra.mxu0 %v419
    %441 = vmatprep.subr.bf16.mxu0 0
    %442 = vmatpush1.bf16.msra.mxu0 %v420
    %443 = vmatprep.subr.bf16.mxu0 0
    %444 = vmatpush1.bf16.msra.mxu0 %v421
    %445 = vmatprep.subr.bf16.mxu0 0
    %446 = vmatpush1.bf16.msra.mxu0 %v422
    %447 = vmatprep.subr.bf16.mxu0 0
    %448 = vmatpush1.bf16.msra.mxu0 0
    %449 = vmatprep.subr.bf16.mxu0 0
    %450 = vmatpush1.bf16.msra.mxu0 0
    %451 = vmatprep.subr.bf16.mxu0 0
    %452 = vmatpush1.bf16.msra.mxu0 0
    %453 = vmatprep.subr.bf16.mxu0 0
    %454 = vmatpush1.bf16.msra.mxu0 0
    %455 = vmatprep.subr.bf16.mxu0 0
    %456 = vmatpush1.bf16.msra.mxu0 0
    %457 = vmatprep.subr.bf16.mxu0 0
    %458 = vmatpush1.bf16.msra.mxu0 0
    %459 = vmatprep.subr.bf16.mxu0 0
    %460 = vmatpush1.bf16.msra.mxu0 0
    %461 = vmatprep.subr.bf16.mxu0 0
    %462 = vmatpush1.bf16.msra.mxu0 0
    %463 = vmatprep.mubr.bf16.mxu0 0
    %464 = vmatmul.mubr.bf16.gmra.mrb[0].mxu0 %v382
    %v465 = vpop.f32.mrb[0].mxu0
    %v466 = vadd.f32 %v229, %v465
    %v467 = vpop.f32.mrb[0].mxu0
    %v468 = vpop.f32.mrb[0].mxu0
    %v469 = vadd.f32 %v233, %v468
    %v470 = vpop.f32.mrb[0].mxu0
    %471 = vdwg.mxu0
    %v472 = vmax.f32 %v466, 0.0
    %v473 = vmax.f32 %v469, 0.0
    %v474 = vpack.c.bf16 %v473, %v472
    %v476 = vlaneseq
    %v477 = vshrl.u32 %v476, 7
    %v478 = vsub.s32 0, %v477
    %v479 = vrot.slane %v100, %v478
    %v497 = vunpack.c.l.b16 %v82
    %v498 = vunpack.c.l.b16 %v83
    %v499 = vunpack.c.l.b16 %v84
    %v500 = vunpack.c.l.b16 %v85
    %v501 = vunpack.c.l.b16 %v86
    %v502 = vunpack.c.l.b16 %v87
    %v503 = vunpack.c.l.b16 %v88
    %v504 = vunpack.c.l.b16 %v89
    %v505 = vunpack.c.l.b16 %v90
    %v506 = vunpack.c.l.b16 %v91
    %v507 = vunpack.c.l.b16 %v92
    %v508 = vunpack.c.l.b16 %v93
    %v509 = vunpack.c.l.b16 %v94
    %v510 = vunpack.c.l.b16 %v95
    %v511 = vunpack.c.l.b16 %v96
    %v512 = vunpack.c.l.b16 %v97
    %v513 = vpack.c.b16 %v498, %v497
    %v514 = vpack.c.b16 %v500, %v499
    %v515 = vpack.c.b16 %v502, %v501
    %v516 = vpack.c.b16 %v504, %v503
    %v517 = vpack.c.b16 %v506, %v505
    %v518 = vpack.c.b16 %v508, %v507
    %v519 = vpack.c.b16 %v510, %v509
    %v520 = vpack.c.b16 %v512, %v511
    %529 = vmatprep.subr.bf16.mxu0 0
    %530 = vmatpush1.bf16.msra.mxu0 %v513
    %531 = vmatprep.subr.bf16.mxu0 0
    %532 = vmatpush1.bf16.msra.mxu0 %v514
    %533 = vmatprep.subr.bf16.mxu0 0
    %534 = vmatpush1.bf16.msra.mxu0 %v515
    %535 = vmatprep.subr.bf16.mxu0 0
    %536 = vmatpush1.bf16.msra.mxu0 %v516
    %537 = vmatprep.subr.bf16.mxu0 0
    %538 = vmatpush1.bf16.msra.mxu0 %v517
    %539 = vmatprep.subr.bf16.mxu0 0
    %540 = vmatpush1.bf16.msra.mxu0 %v518
    %541 = vmatprep.subr.bf16.mxu0 0
    %542 = vmatpush1.bf16.msra.mxu0 %v519
    %543 = vmatprep.subr.bf16.mxu0 0
    %544 = vmatpush1.bf16.msra.mxu0 %v520
    %545 = vmatprep.subr.bf16.mxu0 0
    %546 = vmatpush1.bf16.msra.mxu0 0
    %547 = vmatprep.subr.bf16.mxu0 0
    %548 = vmatpush1.bf16.msra.mxu0 0
    %549 = vmatprep.subr.bf16.mxu0 0
    %550 = vmatpush1.bf16.msra.mxu0 0
    %551 = vmatprep.subr.bf16.mxu0 0
    %552 = vmatpush1.bf16.msra.mxu0 0
    %553 = vmatprep.subr.bf16.mxu0 0
    %554 = vmatpush1.bf16.msra.mxu0 0
    %555 = vmatprep.subr.bf16.mxu0 0
    %556 = vmatpush1.bf16.msra.mxu0 0
    %557 = vmatprep.subr.bf16.mxu0 0
    %558 = vmatpush1.bf16.msra.mxu0 0
    %559 = vmatprep.subr.bf16.mxu0 0
    %560 = vmatpush1.bf16.msra.mxu0 0
    %561 = vmatprep.mubr.bf16.mxu0 0
    %562 = vmatmul.mubr.bf16.gmra.mrb[0].mxu0 %v474
    %v563 = vpop.f32.mrb[0].mxu0
    %v564 = vadd.f32 %v479, %v563
    %v565 = vpop.f32.mrb[0].mxu0
    %v566 = vpop.f32.mrb[0].mxu0
    %v567 = vadd.f32 %v479, %v566
    %v568 = vpop.f32.mrb[0].mxu0
    %569 = vdwg.mxu0
    %v570 = vxor.u32 %v564, 2147483648
    %v571 = vxor.u32 %v567, 2147483648
    %v572 = vmul.f32 %v570, 1.442695
    %v573 = vpow.pop %v572
    %v574 = vmul.f32 %v571, 1.442695
    %v575 = vpow.pop %v574
    %v576 = vadd.f32 %v573, 1.0
    %v577 = vadd.f32 %v575, 1.0
    %v578 = vrcp.pop %v576
    %v579 = vmul.f32 1.0, %v578
    %v580 = vrcp.pop %v577
    %v581 = vmul.f32 1.0, %v580
    %582 = vst [vmem:[%s3] sm:$0xff] %v579
    %583 = vst [vmem:[%s3 + $0x18] sm:$0xff] %v581
    %584 = vst [vmem:[%s3 + $0x8] sm:$0xff] %v364
    %585 = vst [vmem:[%s3 + $0x20] sm:$0xff] %v368
    %586 = vst [vmem:[%s3 + $0x10] sm:$0xff] %v366
    %587 = vst [vmem:[%s3 + $0x28] sm:$0xff] %v370
    // Predicated region
    $region18: #{_cvae_forward.1} parent=1 // pred_check
      _
    $region19: #{_cvae_forward.1} parent=1 // pred_check_branch
      %589 = sbr.rel (0) target = $region21
    $region20: #{_cvae_forward.1} parent=1 // pred_region
      _
    $region21: #{_cvae_forward.1} parent=1 // pred_fallthru
      _
    // Predicated region
    $region22: #{_cvae_forward.1} parent=1 // pred_check
      _
    $region23: #{_cvae_forward.1} parent=1 // pred_check_branch
      %591 = sbr.rel (0) target = $region25
    $region24: #{_cvae_forward.1} parent=1 // pred_region
      _
    $region25: #{_cvae_forward.1} parent=1 // pred_fallthru
      _
    %592 = vsyncpa [#allocation3], 1

</llo_original>
